<compile_context>
chip_gen: v7x
topology: tpu7x:2x2x1
jax: 0.10.0
libtpu: 0.0.40
codegen_flags: <defaults>
</compile_context>

<pallas_src>
import math

import jax
import jax.numpy as jnp
from jax.experimental import pallas as pl
from jax.experimental.pallas import tpu as pltpu


def generate_rank(x, y):
    return min(min(x, y), 8)


def _round_up(x, m):
    return (x + m - 1) // m * m


def _pick_tile(dim, pref, align):
    """Smallest `align`-aligned tile that keeps the tile count of `pref` but
    minimizes padding (e.g. B=260, pref=256 -> tile 136, padded 272 not 512)."""
    dim_a = _round_up(dim, align)
    if dim_a <= pref:
        return dim_a
    n_tiles = -(-dim_a // pref)
    return _round_up(-(-dim_a // n_tiles), align)


def _lowrank_kernel(x_ref, baseT_ref, t_ref, alphaT_ref, bias_ref,
                    o_ref, acc_ref):
    """Grid = (M tiles, N tiles, K tiles); K is the reduction axis (innermost).

    x_ref:      [tm, tk]   activations (compute dtype)
    baseT_ref:  [tk, tn]   base.T tile (compute dtype)
    t_ref:      [tm, R]    precomputed x @ beta.T (compute dtype, const over j,k)
    alphaT_ref: [R,  tn]   (scaling * alpha).T tile (compute dtype, const over k)
    bias_ref:   [1,  tn]   bias tile (f32)
    acc_ref:    [tm, tn]   f32 accumulator scratch
    """
    k = pl.program_id(2)
    nk = pl.num_programs(2)

    @pl.when(k == 0)
    def _init():
        acc_ref[...] = jnp.zeros_like(acc_ref)

    # Base path: acc[tm, tn] += x @ base.T tile   (MXU, f32 accumulate)
    acc_ref[...] += jnp.dot(x_ref[...], baseT_ref[...],
                            preferred_element_type=jnp.float32)

    @pl.when(k == nk - 1)
    def _finalize():
        # low = (x @ beta.T) @ (scaling * alpha).T  -- t precomputed in wrapper,
        # scaling pre-folded into alpha.  Tiny [tm,R]@[R,tn] epilogue matmul.
        low = jnp.dot(t_ref[...], alphaT_ref[...],
                      preferred_element_type=jnp.float32)
        o_ref[...] = (acc_ref[...] + low + bias_ref[...]).astype(o_ref.dtype)


def prepare_lowrank_params(base, alpha, beta, bias, scaling=0.5,
                           *, compute_dtype=jnp.bfloat16):
    """One-time (parameter-load-time) prep: transpose + scale-fold + cast.

    Returns a dict of unpadded, pre-transposed arrays; padding to tile
    multiples is done per-call (it depends on the chosen tiles)."""
    baseT = base.T.astype(compute_dtype)                                   # [IN, OUT]
    alphaT = (alpha.astype(jnp.float32)
              * jnp.float32(scaling)).T.astype(compute_dtype)              # [R, OUT]
    beta_c = beta.astype(compute_dtype)                                    # [R, IN]
    bias2d = bias.reshape(1, -1).astype(jnp.float32)                       # [1, OUT]
    return dict(baseT=baseT, alphaT=alphaT, beta=beta_c, bias=bias2d,
                compute_dtype=compute_dtype)


def lowrank_apply(x, params, *, tm_pref=256, tn_pref=1024, tk_pref=2048):
    """x: [B, IN]  ->  [B, OUT]."""
    baseT, alphaT = params["baseT"], params["alphaT"]
    beta, bias2d = params["beta"], params["bias"]
    cdt = params["compute_dtype"]

    B, IN = x.shape
    OUT = baseT.shape[1]
    R = alphaT.shape[0]

    # ---- tiles: 8-aligned M, 128-aligned (lane-dense) N and K, min padding ----
    tm = _pick_tile(B, tm_pref, 8)
    tn = _pick_tile(OUT, tn_pref, 128)
    tk = _pick_tile(IN, tk_pref, 128)
    Mp, Np, Kp = _round_up(B, tm), _round_up(OUT, tn), _round_up(IN, tk)

    def pad2(a, s0, s1):
        p0, p1 = s0 - a.shape[0], s1 - a.shape[1]
        return jnp.pad(a, ((0, p0), (0, p1))) if (p0 or p1) else a

    x_c = x.astype(cdt)
    # Low-rank projection hoisted out of the kernel's K loop: [B, R], R <= 8.
    t = jnp.dot(x_c, beta.T, preferred_element_type=jnp.float32).astype(cdt)

    x_p      = pad2(x_c, Mp, Kp)        # [Mp, Kp]
    baseT_p  = pad2(baseT, Kp, Np)      # [Kp, Np]
    t_p      = pad2(t, Mp, R)           # [Mp, R]
    alphaT_p = pad2(alphaT, R, Np)      # [R,  Np]
    bias_p   = pad2(bias2d, 1, Np)      # [1,  Np]

    grid = (Mp // tm, Np // tn, Kp // tk)

    out = pl.pallas_call(
        _lowrank_kernel,
        out_shape=jax.ShapeDtypeStruct((Mp, Np), x.dtype),
        grid_spec=pltpu.PrefetchScalarGridSpec(
            num_scalar_prefetch=0,
            grid=grid,
            in_specs=[
                pl.BlockSpec((tm, tk), lambda i, j, k: (i, k)),   # x
                pl.BlockSpec((tk, tn), lambda i, j, k: (k, j)),   # base.T
                pl.BlockSpec((tm, R),  lambda i, j, k: (i, 0)),   # x @ beta.T
                pl.BlockSpec((R, tn),  lambda i, j, k: (0, j)),   # (scaling*alpha).T
                pl.BlockSpec((1, tn),  lambda i, j, k: (0, j)),   # bias
            ],
            out_specs=pl.BlockSpec((tm, tn), lambda i, j, k: (i, j)),
            scratch_shapes=[
                pltpu.VMEM((tm, tn), jnp.float32),   # base-path accumulator
            ],
        ),
        compiler_params=pltpu.CompilerParams(
            dimension_semantics=("parallel", "parallel", "arbitrary")),
    )(x_p, baseT_p, t_p, alphaT_p, bias_p)

    return out[:B, :OUT]


def lowrank_linear(x, base, alpha, beta, bias, scaling=0.5,
                   *, compute_dtype=jnp.bfloat16,
                   tm_pref=256, tn_pref=1024, tk_pref=2048):
    """Convenience wrapper: prep params (normally cached) + apply."""
    params = prepare_lowrank_params(base, alpha, beta, bias, scaling,
                                    compute_dtype=compute_dtype)
    return lowrank_apply(x, params, tm_pref=tm_pref, tn_pref=tn_pref,
                         tk_pref=tk_pref)


def reference(x, base, alpha, beta, bias, scaling=0.5):
    return x @ base.T + scaling * (x @ (alpha @ beta).T) + bias


if __name__ == "__main__":
    # Shapes consistent with the module: a small linear layer.
    B, IN, OUT = 8, 32, 16
    R = generate_rank(IN, OUT)     # min(min(32,16), 8) = 8
    scaling = 0.5                  # scaling == -1 in __init__ -> 0.5

    key = jax.random.PRNGKey(0)
    k_x, k_base, k_bias, k_alpha, k_beta = jax.random.split(key, 5)

    x = jax.random.normal(k_x, (B, IN), dtype=jnp.float32)
    base = jax.random.normal(k_base, (OUT, IN), dtype=jnp.float32) * 0.1
    bias = jax.random.normal(k_bias, (OUT,), dtype=jnp.float32) * 0.1

    # alpha: kaiming_uniform_(a=sqrt(5)) over shape (OUT, R): fan_in = R
    gain = math.sqrt(2.0 / (1.0 + 5.0))
    bound = gain * math.sqrt(3.0 / R)
    alpha = jax.random.uniform(k_alpha, (OUT, R), dtype=jnp.float32,
                               minval=-bound, maxval=bound)
    # Module init is zeros_ for beta; also test a nonzero beta so the
    # low-rank path is actually exercised numerically.
    beta_zero = jnp.zeros((R, IN), dtype=jnp.float32)
    beta_rand = jax.random.normal(k_beta, (R, IN), dtype=jnp.float32) * 0.1

    # f32 operands: tight check against the reference.
    for beta in (beta_zero, beta_rand):
        out = jax.block_until_ready(
            lowrank_linear(x, base, alpha, beta, bias, scaling,
                           compute_dtype=jnp.float32))
        ref = reference(x, base, alpha, beta, bias, scaling)
        assert out.shape == (B, OUT)
        assert jnp.allclose(out, ref, atol=1e-4, rtol=1e-4), "f32 mismatch"

    # Default path: bf16 matmul operands, f32 accumulation (native MXU dtype).
    out_bf16 = jax.block_until_ready(
        lowrank_linear(x, base, alpha, beta_rand, bias, scaling))
    ref = reference(x, base, alpha, beta_rand, bias, scaling)
    assert jnp.allclose(out_bf16, ref, atol=5e-2, rtol=5e-2), "bf16 mismatch"

    # Multi-tile grid (M, N, K all > 1 tile) to exercise the K accumulation
    # and the tile-fitting logic; f32 for a tight check.
    B2, IN2, OUT2 = 24, 384, 256
    R2 = generate_rank(IN2, OUT2)
    kx2, kb2, kbi2, ka2, kbe2 = jax.random.split(jax.random.PRNGKey(1), 5)
    x2 = jax.random.normal(kx2, (B2, IN2), dtype=jnp.float32)
    base2 = jax.random.normal(kb2, (OUT2, IN2), dtype=jnp.float32) * 0.1
    bias2 = jax.random.normal(kbi2, (OUT2,), dtype=jnp.float32) * 0.1
    alpha2 = jax.random.normal(ka2, (OUT2, R2), dtype=jnp.float32) * 0.1
    beta2 = jax.random.normal(kbe2, (R2, IN2), dtype=jnp.float32) * 0.1
    out2 = jax.block_until_ready(
        lowrank_linear(x2, base2, alpha2, beta2, bias2, scaling,
                       compute_dtype=jnp.float32,
                       tm_pref=8, tn_pref=128, tk_pref=128))
    ref2 = reference(x2, base2, alpha2, beta2, bias2, scaling)
    assert out2.shape == (B2, OUT2)
    assert jnp.allclose(out2, ref2, atol=1e-3, rtol=1e-3), "multi-tile mismatch"

    print("KERNEL_OK")
</pallas_src>

<mosaic_0001>
module attributes {stable_mosaic.version = 11 : i64} {
  func.func @_lowrank_kernel(%arg0: i32, %arg1: i32, %arg2: i32, %arg3: memref<8x128xf32, #tpu.memory_space<vmem>>, %arg4: memref<128x128xf32, #tpu.memory_space<vmem>>, %arg5: memref<8x8xf32, #tpu.memory_space<vmem>>, %arg6: memref<8x128xf32, #tpu.memory_space<vmem>>, %arg7: memref<1x128xf32, #tpu.memory_space<vmem>>, %arg8: memref<8x128xf32, #tpu.memory_space<vmem>>, %arg9: memref<8x128xf32, #tpu.memory_space<vmem>>) attributes {dimension_semantics = [#tpu.dimension_semantics<parallel>, #tpu.dimension_semantics<parallel>, #tpu.dimension_semantics<arbitrary>], iteration_bounds = array<i64: 1, 1, 1>, scalar_prefetch = 0 : i64, scratch_operands = 1 : i64, tpu.core_type = #tpu.core_type<tc>, window_params = [{transform_indices = @transform_0, window_bounds = array<i64: 8, 128>}, {transform_indices = @transform_1, window_bounds = array<i64: 128, 128>}, {transform_indices = @transform_2, window_bounds = array<i64: 8, 8>}, {transform_indices = @transform_3, window_bounds = array<i64: 8, 128>}, {transform_indices = @transform_4, window_bounds = array<i64: 1, 128>}, {transform_indices = @transform_5, window_bounds = array<i64: 8, 128>}]} {
    %c0_i32 = arith.constant 0 : i32
    %0 = arith.cmpi eq, %arg2, %c0_i32 : i32
    %1 = arith.extui %0 : i1 to i32
    %c0_i32_0 = arith.constant 0 : i32
    %2 = arith.cmpi ne, %1, %c0_i32_0 : i32
    scf.if %2 {
      %cst_10 = arith.constant 0.000000e+00 : f32
      %12 = vector.broadcast %cst_10 : f32 to vector<8x128xf32>
      %c0_11 = arith.constant 0 : index
      %c0_12 = arith.constant 0 : index
      %13 = vector.load %arg9[%c0_11, %c0_12] : memref<8x128xf32, #tpu.memory_space<vmem>>, vector<8x128xf32>
      tpu.vector_store %arg9[%c0_11, %c0_12], %12 {strides = array<i32>} : memref<8x128xf32, #tpu.memory_space<vmem>>, vector<8x128xf32>,
    } else {
    }
    %c0 = arith.constant 0 : index
    %c0_1 = arith.constant 0 : index
    %3 = vector.load %arg9[%c0, %c0_1] : memref<8x128xf32, #tpu.memory_space<vmem>>, vector<8x128xf32>
    %c0_2 = arith.constant 0 : index
    %c0_3 = arith.constant 0 : index
    %4 = vector.load %arg3[%c0_2, %c0_3] : memref<8x128xf32, #tpu.memory_space<vmem>>, vector<8x128xf32>
    %c0_4 = arith.constant 0 : index
    %c0_5 = arith.constant 0 : index
    %5 = vector.load %arg4[%c0_4, %c0_5] : memref<128x128xf32, #tpu.memory_space<vmem>>, vector<128x128xf32>
    %cst = arith.constant dense<0.000000e+00> : vector<8x128xf32>
    %6 = tpu.matmul %4, %5, %cst {dimension_numbers = #tpu.dot_dimension_numbers<[1], [0], [0], [1], [0, 0, 1, 1], [], []>} : vector<8x128xf32>, vector<128x128xf32>, vector<8x128xf32> -> vector<8x128xf32>
    %7 = arith.addf %3, %6 : vector<8x128xf32>
    %c0_6 = arith.constant 0 : index
    %c0_7 = arith.constant 0 : index
    %8 = vector.load %arg9[%c0_6, %c0_7] : memref<8x128xf32, #tpu.memory_space<vmem>>, vector<8x128xf32>
    tpu.vector_store %arg9[%c0_6, %c0_7], %7 {strides = array<i32>} : memref<8x128xf32, #tpu.memory_space<vmem>>, vector<8x128xf32>,
    %c0_i32_8 = arith.constant 0 : i32
    %9 = arith.cmpi eq, %arg2, %c0_i32_8 : i32
    %10 = arith.extui %9 : i1 to i32
    %c0_i32_9 = arith.constant 0 : i32
    %11 = arith.cmpi ne, %10, %c0_i32_9 : i32
    scf.if %11 {
      %c0_10 = arith.constant 0 : index
      %c0_11 = arith.constant 0 : index
      %12 = vector.load %arg5[%c0_10, %c0_11] : memref<8x8xf32, #tpu.memory_space<vmem>>, vector<8x8xf32>
      %c0_12 = arith.constant 0 : index
      %c0_13 = arith.constant 0 : index
      %13 = vector.load %arg6[%c0_12, %c0_13] : memref<8x128xf32, #tpu.memory_space<vmem>>, vector<8x128xf32>
      %cst_14 = arith.constant dense<0.000000e+00> : vector<8x128xf32>
      %14 = tpu.matmul %12, %13, %cst_14 {dimension_numbers = #tpu.dot_dimension_numbers<[1], [0], [0], [1], [0, 0, 1, 1], [], []>} : vector<8x8xf32>, vector<8x128xf32>, vector<8x128xf32> -> vector<8x128xf32>
      %c0_15 = arith.constant 0 : index
      %c0_16 = arith.constant 0 : index
      %15 = vector.load %arg9[%c0_15, %c0_16] : memref<8x128xf32, #tpu.memory_space<vmem>>, vector<8x128xf32>
      %16 = arith.addf %15, %14 : vector<8x128xf32>
      %c0_17 = arith.constant 0 : index
      %c0_18 = arith.constant 0 : index
      %17 = vector.load %arg7[%c0_17, %c0_18] : memref<1x128xf32, #tpu.memory_space<vmem>>, vector<1x128xf32>
      %18 = vector.broadcast %17 : vector<1x128xf32> to vector<8x128xf32>
      %19 = arith.addf %16, %18 : vector<8x128xf32>
      %c0_19 = arith.constant 0 : index
      %c0_20 = arith.constant 0 : index
      %20 = vector.load %arg8[%c0_19, %c0_20] : memref<8x128xf32, #tpu.memory_space<vmem>>, vector<8x128xf32>
      tpu.vector_store %arg8[%c0_19, %c0_20], %19 {strides = array<i32>} : memref<8x128xf32, #tpu.memory_space<vmem>>, vector<8x128xf32>,
    } else {
    }
    return
  }
  func.func @transform_0(%arg0: i32, %arg1: i32, %arg2: i32) -> (i32, i32) {
    %c0_i32 = arith.constant 0 : i32
    return %arg0, %arg2 : i32, i32
  }
  func.func @transform_1(%arg0: i32, %arg1: i32, %arg2: i32) -> (i32, i32) {
    %c0_i32 = arith.constant 0 : i32
    return %arg2, %arg1 : i32, i32
  }
  func.func @transform_2(%arg0: i32, %arg1: i32, %arg2: i32) -> (i32, i32) {
    %c0_i32 = arith.constant 0 : i32
    %c0_i32_0 = arith.constant 0 : i32
    return %arg0, %c0_i32 : i32, i32
  }
  func.func @transform_3(%arg0: i32, %arg1: i32, %arg2: i32) -> (i32, i32) {
    %c0_i32 = arith.constant 0 : i32
    %c0_i32_0 = arith.constant 0 : i32
    return %c0_i32, %arg1 : i32, i32
  }
  func.func @transform_4(%arg0: i32, %arg1: i32, %arg2: i32) -> (i32, i32) {
    %c0_i32 = arith.constant 0 : i32
    %c0_i32_0 = arith.constant 0 : i32
    return %c0_i32, %arg1 : i32, i32
  }
  func.func @transform_5(%arg0: i32, %arg1: i32, %arg2: i32) -> (i32, i32) {
    %c0_i32 = arith.constant 0 : i32
    return %arg0, %arg1 : i32, i32
  }
}

</mosaic_0001>

<llo_original>
// kernel: tpu_custom_call.1
$region0: #{tpu_custom_call.1}
  #allocation0 [shape = 'u32[]', space=smem, size = 0x4, offset = 0x4, fixed_abs, tag = 'smem constant byte address 0x4 - core index']
  #allocation1 [shape = 'u32[144,128]{1,0:T(1,128)}', space=vmem, size = 0x12000, scoped, tag = 'internal scratch']
  #allocation2 [shape = 'f32[8,128]{1,0:T(8,128)}', space=vmem, size = 0x1000, scoped, tag = 'scratch operand']
  %s0 = inlined_call_operand.hbm [shape: f32[8,128], index: 0, kind: input, shape index: {}]
  %s1 = inlined_call_operand.hbm [shape: f32[128,128], index: 1, kind: input, shape index: {}]
  %s2 = inlined_call_operand.hbm [shape: f32[8,8], index: 2, kind: input, shape index: {}]
  %s3 = inlined_call_operand.vmem [shape: f32[8,128], index: 3, kind: input, shape index: {}]
  %s4 = inlined_call_operand.vmem [shape: f32[1,128], index: 4, kind: input, shape index: {}]
  %s5 = inlined_call_operand.hbm [shape: f32[8,128], index: 5, kind: output, shape index: {}]
  %s6 = sld [smem:[#allocation0]]
  $region50: #{tpu_custom_call.1} parent=0
    _
  %s8 = ssub.s32 1, %s6
  %s9 = scalar_select 0, %s8, %s6
  $region1: #{tpu_custom_call.1} parent=0
    #allocation3 [shape = 'u8[4096]{0}', space=vmem, size = 0x1000, scoped, tag = 'input window, operand 0, single buffered']
    #allocation4 [shape = 's32[1]{0}', space=sflag, size = 0x4, scoped, tag = 'scoped memory for tpu_custom_call.1']
    #allocation5 [shape = 's32[1]{0}', space=sflag, size = 0x4, scoped, tag = 'scoped memory for tpu_custom_call.1']
    #allocation6 [shape = 'u8[65536]{0}', space=vmem, size = 0x10000, scoped, tag = 'input window, operand 1, single buffered']
    #allocation7 [shape = 's32[1]{0}', space=sflag, size = 0x4, scoped, tag = 'scoped memory for tpu_custom_call.1']
    #allocation8 [shape = 'u8[4096]{0}', space=vmem, size = 0x1000, scoped, tag = 'input window, operand 2, single buffered']
    #allocation9 [shape = 'u8[4096]{0}', space=vmem, size = 0x1000, scoped, tag = 'output window, operand 0, single buffered']
    %10 = vsyncpa [#allocation4], 0
    %11 = vsyncpa [#allocation7], 0
    %12 = vsyncpa [#allocation5], 0
    // Predicated region
    $region2: #{tpu_custom_call.1} parent=1 // pred_check
      _
    $region3: #{tpu_custom_call.1} parent=1 // pred_check_branch
      %14 = sbr.rel (0) target = $region5
    $region4: #{tpu_custom_call.1} parent=1 // pred_region
      %s16 = ssub.s32 128, 128
      %17 = vsyncadd [#allocation4], %s16
      %s19 = sshll.u32 [#allocation3], 4
      %s20 = int_to_ptr.vmem [resolvable:$true] %s19
      %22 = dma.hbm_to_vmem [thread:$0]  %s0, 128, %s20, [#allocation4]
    $region5: #{tpu_custom_call.1} parent=1 // pred_fallthru
      _
    // Predicated region
    $region6: #{tpu_custom_call.1} parent=1 // pred_check
      _
    $region7: #{tpu_custom_call.1} parent=1 // pred_check_branch
      %24 = sbr.rel (0) target = $region9
    $region8: #{tpu_custom_call.1} parent=1 // pred_region
      %s26 = ssub.s32 2048, 2048
      %27 = vsyncadd [#allocation7], %s26
      %s28 = sshll.u32 [#allocation6], 4
      %s29 = int_to_ptr.vmem [resolvable:$true] %s28
      %34 = dma.hbm_to_vmem [thread:$0]  %s1, 2048, %s29, [#allocation7], 128, 128, 8
    $region9: #{tpu_custom_call.1} parent=1 // pred_fallthru
      _
    // Predicated region
    $region10: #{tpu_custom_call.1} parent=1 // pred_check
      _
    $region11: #{tpu_custom_call.1} parent=1 // pred_check_branch
      %36 = sbr.rel (0) target = $region13
    $region12: #{tpu_custom_call.1} parent=1 // pred_region
      %s38 = ssub.s32 128, 128
      %39 = vsyncadd [#allocation7], %s38
      %s41 = sshll.u32 [#allocation8], 4
      %s42 = int_to_ptr.vmem [resolvable:$true] %s41
      %44 = dma.hbm_to_vmem [thread:$0]  %s2, 128, %s42, [#allocation7]
    $region13: #{tpu_custom_call.1} parent=1 // pred_fallthru
      _
    // Predicated region
    $region14: #{tpu_custom_call.1} parent=1 // pred_check
      _
    $region15: #{tpu_custom_call.1} parent=1 // pred_check_branch
      %46 = sbr.rel (0) target = $region17
    $region16: #{tpu_custom_call.1} parent=1 // pred_region
      _
    $region17: #{tpu_custom_call.1} parent=1 // pred_fallthru
      _
    // Predicated region
    $region18: #{tpu_custom_call.1} parent=1 // pred_check
      _
    $region19: #{tpu_custom_call.1} parent=1 // pred_check_branch
      %48 = sbr.rel (0) target = $region21
    $region20: #{tpu_custom_call.1} parent=1 // pred_region
      _
    $region21: #{tpu_custom_call.1} parent=1 // pred_fallthru
      _
    // Predicated region
    $region22: #{tpu_custom_call.1} parent=1 // pred_check
      _
    $region23: #{tpu_custom_call.1} parent=1 // pred_check_branch
      %50 = sbr.rel (0) target = $region25
    $region24: #{tpu_custom_call.1} parent=1 // pred_region
      %51 = dma.done [#allocation4], 128
    $region25: #{tpu_custom_call.1} parent=1 // pred_fallthru
      _
    // Predicated region
    $region26: #{tpu_custom_call.1} parent=1 // pred_check
      _
    $region27: #{tpu_custom_call.1} parent=1 // pred_check_branch
      %53 = sbr.rel (0) target = $region29
    $region28: #{tpu_custom_call.1} parent=1 // pred_region
      %54 = dma.done [#allocation7], 2048
    $region29: #{tpu_custom_call.1} parent=1 // pred_fallthru
      _
    // Predicated region
    $region30: #{tpu_custom_call.1} parent=1 // pred_check
      _
    $region31: #{tpu_custom_call.1} parent=1 // pred_check_branch
      %56 = sbr.rel (0) target = $region33
    $region32: #{tpu_custom_call.1} parent=1 // pred_region
      %57 = dma.done [#allocation7], 128
    $region33: #{tpu_custom_call.1} parent=1 // pred_fallthru
      _
    %p58 = scmp.eq.s32.totalorder 0, 0
    // Predicated region
    $region34: #{tpu_custom_call.1} parent=1 // pred_check
      %p59 = pneg %p58
    $region35: #{tpu_custom_call.1} parent=1 // pred_check_branch
      %61 = sbr.rel (%p59) target = $region37
    $region36: #{tpu_custom_call.1} parent=1 // pred_region
      %62 = vst [vmem:[#allocation2] sm:$0xff] 0.0
    $region37: #{tpu_custom_call.1} parent=1 // pred_fallthru
      _
    %v63 = vld [vmem:[#allocation2] sm:$0xff]
    %v64 = vld [vmem:[#allocation3] sm:$0xff]
    %v65 = vld [vmem:[#allocation6] sm:$0xff]
    %v66 = vld [vmem:[#allocation6 + $0x8] sm:$0xff]
    %v67 = vld [vmem:[#allocation6 + $0x10] sm:$0xff]
    %v68 = vld [vmem:[#allocation6 + $0x18] sm:$0xff]
    %v69 = vld [vmem:[#allocation6 + $0x20] sm:$0xff]
    %v70 = vld [vmem:[#allocation6 + $0x28] sm:$0xff]
    %v71 = vld [vmem:[#allocation6 + $0x30] sm:$0xff]
    %v72 = vld [vmem:[#allocation6 + $0x38] sm:$0xff]
    %v73 = vld [vmem:[#allocation6 + $0x40] sm:$0xff]
    %v74 = vld [vmem:[#allocation6 + $0x48] sm:$0xff]
    %v75 = vld [vmem:[#allocation6 + $0x50] sm:$0xff]
    %v76 = vld [vmem:[#allocation6 + $0x58] sm:$0xff]
    %v77 = vld [vmem:[#allocation6 + $0x60] sm:$0xff]
    %v78 = vld [vmem:[#allocation6 + $0x68] sm:$0xff]
    %v79 = vld [vmem:[#allocation6 + $0x70] sm:$0xff]
    %v80 = vld [vmem:[#allocation6 + $0x78] sm:$0xff]
    %81 = vmatprep.subr.mxu0 0.0
    %82 = vmatpush1.msra.mxu0 %v65
    %83 = vmatprep.subr.mxu0 0.0
    %84 = vmatpush1.msra.mxu0 %v66
    %85 = vmatprep.subr.mxu0 0.0
    %86 = vmatpush1.msra.mxu0 %v67
    %87 = vmatprep.subr.mxu0 0.0
    %88 = vmatpush1.msra.mxu0 %v68
    %89 = vmatprep.subr.mxu0 0.0
    %90 = vmatpush1.msra.mxu0 %v69
    %91 = vmatprep.subr.mxu0 0.0
    %92 = vmatpush1.msra.mxu0 %v70
    %93 = vmatprep.subr.mxu0 0.0
    %94 = vmatpush1.msra.mxu0 %v71
    %95 = vmatprep.subr.mxu0 0.0
    %96 = vmatpush1.msra.mxu0 %v72
    %97 = vmatprep.subr.mxu0 0.0
    %98 = vmatpush1.msra.mxu0 %v73
    %99 = vmatprep.subr.mxu0 0.0
    %100 = vmatpush1.msra.mxu0 %v74
    %101 = vmatprep.subr.mxu0 0.0
    %102 = vmatpush1.msra.mxu0 %v75
    %103 = vmatprep.subr.mxu0 0.0
    %104 = vmatpush1.msra.mxu0 %v76
    %105 = vmatprep.subr.mxu0 0.0
    %106 = vmatpush1.msra.mxu0 %v77
    %107 = vmatprep.subr.mxu0 0.0
    %108 = vmatpush1.msra.mxu0 %v78
    %109 = vmatprep.subr.mxu0 0.0
    %110 = vmatpush1.msra.mxu0 %v79
    %111 = vmatprep.subr.mxu0 0.0
    %112 = vmatpush1.msra.mxu0 %v80
    %113 = vmatprep.subr.mxu0 0.0
    %114 = vmatpush1.msra.mxu0 0.0
    %115 = vmatprep.subr.mxu0 0.0
    %116 = vmatpush1.msra.mxu0 0.0
    %117 = vmatprep.subr.mxu0 0.0
    %118 = vmatpush1.msra.mxu0 0.0
    %119 = vmatprep.subr.mxu0 0.0
    %120 = vmatpush1.msra.mxu0 0.0
    %121 = vmatprep.subr.mxu0 0.0
    %122 = vmatpush1.msra.mxu0 0.0
    %123 = vmatprep.subr.mxu0 0.0
    %124 = vmatpush1.msra.mxu0 0.0
    %125 = vmatprep.subr.mxu0 0.0
    %126 = vmatpush1.msra.mxu0 0.0
    %127 = vmatprep.subr.mxu0 0.0
    %128 = vmatpush1.msra.mxu0 0.0
    %129 = vmatprep.subr.mxu0 0.0
    %130 = vmatpush1.msra.mxu0 0.0
    %131 = vmatprep.subr.mxu0 0.0
    %132 = vmatpush1.msra.mxu0 0.0
    %133 = vmatprep.subr.mxu0 0.0
    %134 = vmatpush1.msra.mxu0 0.0
    %135 = vmatprep.subr.mxu0 0.0
    %136 = vmatpush1.msra.mxu0 0.0
    %137 = vmatprep.subr.mxu0 0.0
    %138 = vmatpush1.msra.mxu0 0.0
    %139 = vmatprep.subr.mxu0 0.0
    %140 = vmatpush1.msra.mxu0 0.0
    %141 = vmatprep.subr.mxu0 0.0
    %142 = vmatpush1.msra.mxu0 0.0
    %143 = vmatprep.subr.mxu0 0.0
    %144 = vmatpush1.msra.mxu0 0.0
    %145 = vmatprep.mubr.f32.mxu0 0.0
    %146 = vmatmul.mubr.f32.gmra.mrb[0].mxu0 %v64
    %v147 = vpop.f32.mrb[0].mxu0
    %v148 = vadd.f32 0.0, %v147
    %v149 = vpop.f32.mrb[0].mxu0
    %150 = vdwg.mxu0
    %v151 = vadd.f32 %v63, %v148
    %152 = vst [vmem:[#allocation2] sm:$0xff] %v151
    // Predicated region
    $region38: #{tpu_custom_call.1} parent=1 // pred_check
      %p153 = pneg %p58
    $region39: #{tpu_custom_call.1} parent=1 // pred_check_branch
      %155 = sbr.rel (%p153) target = $region41
    $region40: #{tpu_custom_call.1} parent=1 // pred_region
      %v156 = vld [vmem:[#allocation8] sm:$0xff]
      %v157 = vld [vmem:[%s3] sm:$0xff]
      %vm158 = vcmask 64512
      %v160 = vsel %vm158, %v156, 0
      %162 = vmatprep.subr.mxu0 0.0
      %163 = vmatpush1.msra.mxu0 %v157
      %164 = vmatprep.subr.mxu0 0.0
      %165 = vmatpush1.msra.mxu0 0.0
      %166 = vmatprep.subr.mxu0 0.0
      %167 = vmatpush1.msra.mxu0 0.0
      %168 = vmatprep.subr.mxu0 0.0
      %169 = vmatpush1.msra.mxu0 0.0
      %170 = vmatprep.subr.mxu0 0.0
      %171 = vmatpush1.msra.mxu0 0.0
      %172 = vmatprep.subr.mxu0 0.0
      %173 = vmatpush1.msra.mxu0 0.0
      %174 = vmatprep.subr.mxu0 0.0
      %175 = vmatpush1.msra.mxu0 0.0
      %176 = vmatprep.subr.mxu0 0.0
      %177 = vmatpush1.msra.mxu0 0.0
      %178 = vmatprep.subr.mxu0 0.0
      %179 = vmatpush1.msra.mxu0 0.0
      %180 = vmatprep.subr.mxu0 0.0
      %181 = vmatpush1.msra.mxu0 0.0
      %182 = vmatprep.subr.mxu0 0.0
      %183 = vmatpush1.msra.mxu0 0.0
      %184 = vmatprep.subr.mxu0 0.0
      %185 = vmatpush1.msra.mxu0 0.0
      %186 = vmatprep.subr.mxu0 0.0
      %187 = vmatpush1.msra.mxu0 0.0
      %188 = vmatprep.subr.mxu0 0.0
      %189 = vmatpush1.msra.mxu0 0.0
      %190 = vmatprep.subr.mxu0 0.0
      %191 = vmatpush1.msra.mxu0 0.0
      %192 = vmatprep.subr.mxu0 0.0
      %193 = vmatpush1.msra.mxu0 0.0
      %194 = vmatprep.subr.mxu0 0.0
      %195 = vmatpush1.msra.mxu0 0.0
      %196 = vmatprep.subr.mxu0 0.0
      %197 = vmatpush1.msra.mxu0 0.0
      %198 = vmatprep.subr.mxu0 0.0
      %199 = vmatpush1.msra.mxu0 0.0
      %200 = vmatprep.subr.mxu0 0.0
      %201 = vmatpush1.msra.mxu0 0.0
      %202 = vmatprep.subr.mxu0 0.0
      %203 = vmatpush1.msra.mxu0 0.0
      %204 = vmatprep.subr.mxu0 0.0
      %205 = vmatpush1.msra.mxu0 0.0
      %206 = vmatprep.subr.mxu0 0.0
      %207 = vmatpush1.msra.mxu0 0.0
      %208 = vmatprep.subr.mxu0 0.0
      %209 = vmatpush1.msra.mxu0 0.0
      %210 = vmatprep.subr.mxu0 0.0
      %211 = vmatpush1.msra.mxu0 0.0
      %212 = vmatprep.subr.mxu0 0.0
      %213 = vmatpush1.msra.mxu0 0.0
      %214 = vmatprep.subr.mxu0 0.0
      %215 = vmatpush1.msra.mxu0 0.0
      %216 = vmatprep.subr.mxu0 0.0
      %217 = vmatpush1.msra.mxu0 0.0
      %218 = vmatprep.subr.mxu0 0.0
      %219 = vmatpush1.msra.mxu0 0.0
      %220 = vmatprep.subr.mxu0 0.0
      %221 = vmatpush1.msra.mxu0 0.0
      %222 = vmatprep.subr.mxu0 0.0
      %223 = vmatpush1.msra.mxu0 0.0
      %224 = vmatprep.subr.mxu0 0.0
      %225 = vmatpush1.msra.mxu0 0.0
      %226 = vmatprep.mubr.f32.mxu0 0.0
      %227 = vmatmul.mubr.f32.gmra.mrb[0].mxu0 %v160
      %v228 = vpop.f32.mrb[0].mxu0
      %v229 = vadd.f32 0.0, %v228
      %v230 = vpop.f32.mrb[0].mxu0
      %231 = vdwg.mxu0
      %v232 = vld [vmem:[#allocation2] sm:$0xff]
      %v233 = vadd.f32 %v232, %v229
      %v234 = vld [vmem:[%s4] sm:$0x1]
      %v236 = vlaneseq
      %v237 = vshrl.u32 %v236, 7
      %v238 = vsub.s32 0, %v237
      %v239 = vrot.slane %v234, %v238
      %v241 = vadd.f32 %v233, %v239
      %242 = vst [vmem:[#allocation9] sm:$0xff] %v241
    $region41: #{tpu_custom_call.1} parent=1 // pred_fallthru
      _
    // Predicated region
    $region42: #{tpu_custom_call.1} parent=1 // pred_check
      _
    $region43: #{tpu_custom_call.1} parent=1 // pred_check_branch
      %244 = sbr.rel (0) target = $region45
    $region44: #{tpu_custom_call.1} parent=1 // pred_region
      %s246 = ssub.s32 128, 128
      %247 = vsyncadd [#allocation5], %s246
      %s249 = sshll.u32 [#allocation9], 4
      %s250 = int_to_ptr.vmem [resolvable:$true] %s249
      %252 = dma.vmem_to_hbm [thread:$0]  %s250, 128, %s5, [#allocation5]
    $region45: #{tpu_custom_call.1} parent=1 // pred_fallthru
      _
    // Predicated region
    $region46: #{tpu_custom_call.1} parent=1 // pred_check
      _
    $region47: #{tpu_custom_call.1} parent=1 // pred_check_branch
      %254 = sbr.rel (0) target = $region49
    $region48: #{tpu_custom_call.1} parent=1 // pred_region
      %255 = dma.done [#allocation5], 128
    $region49: #{tpu_custom_call.1} parent=1 // pred_fallthru
      _
    %256 = vsyncpa [#allocation4], 1
    %257 = vsyncpa [#allocation7], 1
    %258 = vsyncpa [#allocation5], 1

</llo_original>
